<compile_context>
chip_gen: v7x
topology: tpu7x:2x2x1
jax: 0.10.0
libtpu: 0.0.40
codegen_flags: <defaults>
</compile_context>

<pallas_src>
import functools
import math

import jax
import jax.numpy as jnp
from jax.experimental import pallas as pl
from jax.experimental.pallas import tpu as pltpu


# ---------------------------------------------------------------------------
# Parameter setup (matches PositionalEncoding.__init__)
# ---------------------------------------------------------------------------
def make_positional_encoding(embedding_dim: int, max_len: int = 5000) -> jnp.ndarray:
    position = jnp.arange(0, max_len, dtype=jnp.float32)[:, None]          # (max_len, 1)
    div_term = jnp.exp(
        jnp.arange(0, embedding_dim, 2, dtype=jnp.float32)
        * (-math.log(10000.0) / embedding_dim)
    )                                                                       # (ceil(E/2),)
    pe = jnp.zeros((max_len, embedding_dim), dtype=jnp.float32)
    pe = pe.at[:, 0::2].set(jnp.sin(position * div_term))
    if embedding_dim % 2 == 0:
        pe = pe.at[:, 1::2].set(jnp.cos(position * div_term))
    else:
        pe = pe.at[:, 1::2].set(jnp.cos(position * div_term[:-1]))
    return pe[None]                                                         # (1, max_len, E)


# ---------------------------------------------------------------------------
# Counter-based hash PRNG (splitmix32-style) — pure elementwise uint32 ops,
# lowers on both Mosaic (VPU) and interpret mode.
# ---------------------------------------------------------------------------
def _mix_u32(x):
    x = x ^ (x >> 16)
    x = x * jnp.uint32(0x7FEB352D)
    x = x ^ (x >> 15)
    x = x * jnp.uint32(0x846CA68B)
    x = x ^ (x >> 16)
    return x


# ---------------------------------------------------------------------------
# Pallas kernel: (x + pe) then inverted dropout
# ---------------------------------------------------------------------------
def _pe_dropout_kernel(seed_ref, x_ref, pe_ref, o_ref, *,
                       p: float, training: bool, tS: int, E_f: int, per_batch: int):
    # x_ref, pe_ref, o_ref: (tS, E_f) blocks (batch dim squeezed).
    y = x_ref[...] + pe_ref[...]                      # native-dtype add

    if training and p > 0.0:
        if p >= 1.0:
            # PyTorch dropout with p=1 zeros everything.
            y = jnp.zeros_like(y)
        else:
            s_tile = pl.program_id(0)
            b = pl.program_id(1)
            row = jax.lax.broadcasted_iota(jnp.int32, (tS, E_f), 0)
            col = jax.lax.broadcasted_iota(jnp.int32, (tS, E_f), 1)
            # Flat logical element index within this batch element; invariant
            # to the tiling / lane-folding, so the mask is deterministic.
            flat = (s_tile * tS + row) * E_f + col
            ctr = (b * per_batch + flat).astype(jnp.uint32)
            k = _mix_u32(seed_ref[0].astype(jnp.uint32) + jnp.uint32(0x9E3779B9))
            bits = _mix_u32(ctr ^ k)
            r = (bits >> 1).astype(jnp.int32)          # uniform in [0, 2^31)
            threshold = jnp.int32(min(int(p * (2.0 ** 31)), 2 ** 31 - 1))
            keep = (r >= threshold).astype(y.dtype)    # keep prob = 1 - p
            y = y * (keep * jnp.asarray(1.0 / (1.0 - p), dtype=y.dtype))

    o_ref[...] = y.astype(o_ref.dtype)


# ---------------------------------------------------------------------------
# Wrapper helpers
# ---------------------------------------------------------------------------
def _fold_factor(S: int, E: int, lane: int = 128) -> int:
    """Smallest g dividing S such that g*E is a multiple of 128 (lane-dense)."""
    if E % lane == 0:
        return 1
    for g in range(1, S + 1):
        if S % g == 0 and (g * E) % lane == 0:
            return g
    return 1


def _pick_tile(S_f: int, E_f: int, itemsize: int,
               target_bytes: int = 2 * 1024 * 1024) -> int:
    """Largest seq tile that divides S_f, is a multiple of 8, and keeps a block
    at ~target_bytes so double-buffered x/pe/out fit every gen's scoped VMEM."""
    max_rows = max(8, target_bytes // max(1, E_f * itemsize))
    if S_f <= max_rows:
        return S_f
    cand = (max_rows // 8) * 8
    while cand >= 8:
        if S_f % cand == 0:
            return cand
        cand -= 8
    return S_f


# ---------------------------------------------------------------------------
# Wrapper
# ---------------------------------------------------------------------------
def positional_encoding_forward(x, pe_table, *, seed: int = 0, p: float = 0.1,
                                training: bool = True):
    """x: (B, S, E); pe_table: (1, max_len, E) from make_positional_encoding."""
    B, S, E = x.shape
    pe = pe_table[0, :S, :].astype(x.dtype)                         # (S, E), native dtype

    # Fold seq rows into the lane axis so the last dim is a multiple of 128.
    g = _fold_factor(S, E, 128)
    S_f, E_f = S // g, E * g
    x_f = x.reshape(B, S_f, E_f)
    pe_f = pe.reshape(S_f, E_f)

    tS = _pick_tile(S_f, E_f, x.dtype.itemsize)
    per_batch = (S_f * E_f) & 0x7FFFFFFF                            # int32-safe offset

    seed_arr = jnp.array([seed], dtype=jnp.int32)
    kernel = functools.partial(_pe_dropout_kernel, p=float(p), training=bool(training),
                               tS=tS, E_f=E_f, per_batch=per_batch)

    out_f = pl.pallas_call(
        kernel,
        out_shape=jax.ShapeDtypeStruct((B, S_f, E_f), x.dtype),
        grid_spec=pltpu.PrefetchScalarGridSpec(
            num_scalar_prefetch=1,                 # seed lands in SMEM
            grid=(S_f // tS, B),                   # batch innermost -> pe tile stays resident
            in_specs=[
                pl.BlockSpec((None, tS, E_f), lambda s, b, seed: (b, s, 0)),  # x
                pl.BlockSpec((tS, E_f), lambda s, b, seed: (s, 0)),           # pe (b-invariant)
            ],
            out_specs=pl.BlockSpec((None, tS, E_f), lambda s, b, seed: (b, s, 0)),
        ),
        compiler_params=pltpu.CompilerParams(
            dimension_semantics=("parallel", "parallel"),
        ),
    )(seed_arr, x_f, pe_f)

    return out_f.reshape(B, S, E)


# ---------------------------------------------------------------------------
# Demo
# ---------------------------------------------------------------------------
if __name__ == "__main__":
    key = jax.random.PRNGKey(0)
    B, S, E = 2, 8, 32
    max_len = 64                     # forward only uses pe[:, :S, :]

    x = jax.random.normal(key, (B, S, E), dtype=jnp.float32)
    pe_table = make_positional_encoding(E, max_len=max_len)

    # Training-mode forward (add PE + dropout(p=0.1), inverted scaling).
    out = positional_encoding_forward(x, pe_table, seed=0, p=0.1, training=True)
    out = jax.block_until_ready(out)

    # Eval-mode (no dropout) check against the reference add.
    out_eval = positional_encoding_forward(x, pe_table, seed=0, p=0.1, training=False)
    out_eval = jax.block_until_ready(out_eval)

    ref = x + pe_table[:, :S, :]
    assert out.shape == (B, S, E) and out.dtype == x.dtype
    assert jnp.allclose(out_eval, ref, atol=1e-6)

    # Training path: every kept element equals ref/(1-p); dropped elements are 0.
    kept = out != 0
    assert jnp.allclose(jnp.where(kept, out, 0.0),
                        jnp.where(kept, ref / (1.0 - 0.1), 0.0), atol=1e-5)

    print("KERNEL_OK")
</pallas_src>

<mosaic_0001>
module attributes {stable_mosaic.version = 11 : i64} {
  func.func @_pe_dropout_kernel(%arg0: i32, %arg1: i32, %arg2: memref<1xi32, #tpu.memory_space<smem>>, %arg3: memref<1x2x128xf32, #tpu.memory_space<vmem>>, %arg4: memref<2x128xf32, #tpu.memory_space<vmem>>, %arg5: memref<1x2x128xf32, #tpu.memory_space<vmem>>) attributes {dimension_semantics = [#tpu.dimension_semantics<parallel>, #tpu.dimension_semantics<parallel>], iteration_bounds = array<i64: 1, 2>, scalar_prefetch = 1 : i64, scratch_operands = 0 : i64, tpu.core_type = #tpu.core_type<tc>, window_params = [{transform_indices = @transform_0, window_bounds = array<i64: 1, 2, 128>}, {transform_indices = @transform_1, window_bounds = array<i64: 2, 128>}, {transform_indices = @transform_2, window_bounds = array<i64: 1, 2, 128>}]} {
    %c0 = arith.constant 0 : index
    %c0_0 = arith.constant 0 : index
    %c0_1 = arith.constant 0 : index
    %0 = vector.load %arg3[%c0, %c0_0, %c0_1] : memref<1x2x128xf32, #tpu.memory_space<vmem>>, vector<1x2x128xf32>
    %1 = vector.shape_cast %0 : vector<1x2x128xf32> to vector<2x128xf32>
    %c0_2 = arith.constant 0 : index
    %c0_3 = arith.constant 0 : index
    %2 = vector.load %arg4[%c0_2, %c0_3] : memref<2x128xf32, #tpu.memory_space<vmem>>, vector<2x128xf32>
    %3 = arith.addf %1, %2 : vector<2x128xf32>
    %4 = tpu.iota {dimensions = array<i32: 0>} : vector<2x128xi32>
    %5 = tpu.iota {dimensions = array<i32: 1>} : vector<2x128xi32>
    %c2_i32 = arith.constant 2 : i32
    %6 = arith.muli %arg0, %c2_i32 : i32
    %7 = vector.broadcast %6 : i32 to vector<2x128xi32>
    %8 = arith.addi %7, %4 : vector<2x128xi32>
    %c128_i32 = arith.constant 128 : i32
    %9 = vector.broadcast %c128_i32 : i32 to vector<2x128xi32>
    %10 = arith.muli %8, %9 : vector<2x128xi32>
    %11 = arith.addi %10, %5 : vector<2x128xi32>
    %c256_i32 = arith.constant 256 : i32
    %12 = arith.muli %arg1, %c256_i32 : i32
    %13 = vector.broadcast %12 : i32 to vector<2x128xi32>
    %14 = arith.addi %13, %11 : vector<2x128xi32>
    %c0_4 = arith.constant 0 : index
    %15 = memref.load %arg2[%c0_4] : memref<1xi32, #tpu.memory_space<smem>>
    %c-1640531527_i32 = arith.constant -1640531527 : i32
    %16 = arith.addi %15, %c-1640531527_i32 : i32
    %c16_i32 = arith.constant 16 : i32
    %17 = arith.shrui %16, %c16_i32 : i32
    %18 = arith.xori %16, %17 : i32
    %c2146121005_i32 = arith.constant 2146121005 : i32
    %19 = arith.muli %18, %c2146121005_i32 : i32
    %c15_i32 = arith.constant 15 : i32
    %20 = arith.shrui %19, %c15_i32 : i32
    %21 = arith.xori %19, %20 : i32
    %c-2073254261_i32 = arith.constant -2073254261 : i32
    %22 = arith.muli %21, %c-2073254261_i32 : i32
    %c16_i32_5 = arith.constant 16 : i32
    %23 = arith.shrui %22, %c16_i32_5 : i32
    %24 = arith.xori %22, %23 : i32
    %25 = vector.broadcast %24 : i32 to vector<2x128xi32>
    %26 = arith.xori %14, %25 : vector<2x128xi32>
    %c16_i32_6 = arith.constant 16 : i32
    %27 = vector.broadcast %c16_i32_6 : i32 to vector<2x128xi32>
    %28 = arith.shrui %26, %27 : vector<2x128xi32>
    %29 = arith.xori %26, %28 : vector<2x128xi32>
    %c2146121005_i32_7 = arith.constant 2146121005 : i32
    %30 = vector.broadcast %c2146121005_i32_7 : i32 to vector<2x128xi32>
    %31 = arith.muli %29, %30 : vector<2x128xi32>
    %c15_i32_8 = arith.constant 15 : i32
    %32 = vector.broadcast %c15_i32_8 : i32 to vector<2x128xi32>
    %33 = arith.shrui %31, %32 : vector<2x128xi32>
    %34 = arith.xori %31, %33 : vector<2x128xi32>
    %c-2073254261_i32_9 = arith.constant -2073254261 : i32
    %35 = vector.broadcast %c-2073254261_i32_9 : i32 to vector<2x128xi32>
    %36 = arith.muli %34, %35 : vector<2x128xi32>
    %c16_i32_10 = arith.constant 16 : i32
    %37 = vector.broadcast %c16_i32_10 : i32 to vector<2x128xi32>
    %38 = arith.shrui %36, %37 : vector<2x128xi32>
    %39 = arith.xori %36, %38 : vector<2x128xi32>
    %c1_i32 = arith.constant 1 : i32
    %40 = vector.broadcast %c1_i32 : i32 to vector<2x128xi32>
    %41 = arith.shrui %39, %40 : vector<2x128xi32>
    %c214748364_i32 = arith.constant 214748364 : i32
    %42 = vector.broadcast %c214748364_i32 : i32 to vector<2x128xi32>
    %43 = arith.cmpi sge, %41, %42 : vector<2x128xi32>
    %44 = arith.extui %43 : vector<2x128xi1> to vector<2x128xi32>
    %45 = arith.sitofp %44 : vector<2x128xi32> to vector<2x128xf32>
    %cst = arith.constant 1.11111116 : f32
    %46 = vector.broadcast %cst : f32 to vector<2x128xf32>
    %47 = arith.mulf %45, %46 : vector<2x128xf32>
    %48 = arith.mulf %3, %47 : vector<2x128xf32>
    %c0_11 = arith.constant 0 : index
    %c0_12 = arith.constant 0 : index
    %c0_13 = arith.constant 0 : index
    %49 = vector.load %arg5[%c0_11, %c0_12, %c0_13] : memref<1x2x128xf32, #tpu.memory_space<vmem>>, vector<1x2x128xf32>
    %50 = vector.shape_cast %49 : vector<1x2x128xf32> to vector<2x128xf32>
    %51 = vector.shape_cast %48 : vector<2x128xf32> to vector<1x2x128xf32>
    tpu.vector_store %arg5[%c0_11, %c0_12, %c0_13], %51 {strides = array<i32>} : memref<1x2x128xf32, #tpu.memory_space<vmem>>, vector<1x2x128xf32>,
    return
  }
  func.func @transform_0(%arg0: i32, %arg1: i32, %arg2: memref<1xi32, #tpu.memory_space<smem>>) -> (i32, i32, i32) {
    %c0_i32 = arith.constant 0 : i32
    %c0_i32_0 = arith.constant 0 : i32
    return %arg1, %arg0, %c0_i32 : i32, i32, i32
  }
  func.func @transform_1(%arg0: i32, %arg1: i32, %arg2: memref<1xi32, #tpu.memory_space<smem>>) -> (i32, i32) {
    %c0_i32 = arith.constant 0 : i32
    %c0_i32_0 = arith.constant 0 : i32
    return %arg0, %c0_i32 : i32, i32
  }
  func.func @transform_2(%arg0: i32, %arg1: i32, %arg2: memref<1xi32, #tpu.memory_space<smem>>) -> (i32, i32, i32) {
    %c0_i32 = arith.constant 0 : i32
    %c0_i32_0 = arith.constant 0 : i32
    return %arg1, %arg0, %c0_i32 : i32, i32, i32
  }
}

</mosaic_0001>

<llo_original>
// kernel: tpu_custom_call.1
$region0: #{tpu_custom_call.1}
  #allocation0 [shape = 'u32[]', space=smem, size = 0x4, offset = 0x4, fixed_abs, tag = 'smem constant byte address 0x4 - core index']
  #allocation1 [shape = 'u32[144,128]{1,0:T(1,128)}', space=vmem, size = 0x12000, scoped, tag = 'internal scratch']
  #allocation2 [shape = 's32[1]{0}', space=sflag, size = 0x4, scoped, tag = 'scoped memory for tpu_custom_call.1']
  #allocation3 [shape = 's32[1]{0:T(128)S(6)}', space=smem, size = 0x200, scoped, tag = 'prefetched SMEM operand 0']
  %s0 = inlined_call_operand.<no memory space> [shape: s32[1], index: 0, kind: input, shape index: {}]
  %s1 = inlined_call_operand.hbm [shape: f32[2,2,128], index: 1, kind: input, shape index: {}]
  %s2 = inlined_call_operand.vmem [shape: f32[2,128], index: 2, kind: input, shape index: {}]
  %s3 = inlined_call_operand.hbm [shape: f32[2,2,128], index: 3, kind: output, shape index: {}]
  %s4 = sld [smem:[#allocation0]]
  $region45: #{tpu_custom_call.1} parent=0
    _
  %s6 = ssub.s32 1, %s4
  %s7 = scalar_select 0, %s6, %s4
  %8 = sst [smem:[#allocation3]] %s0
  $region1: #{tpu_custom_call.1} parent=0
    #allocation4 [shape = 'u8[2048]{0}', space=vmem, size = 0x800, scoped, tag = 'input window, operand 1']
    #allocation5 [shape = 's32[2]{0}', space=sflag, size = 0x8, scoped, tag = 'scoped memory for tpu_custom_call.1']
    #allocation6 [shape = 's32[2]{0}', space=sflag, size = 0x8, scoped, tag = 'scoped memory for tpu_custom_call.1']
    #allocation7 [shape = 'u8[2048]{0}', space=vmem, size = 0x800, scoped, tag = 'output window, operand 0']
    %9 = vsyncpa [#allocation5], 0
    %s10 = scalar_lea.sflag [#allocation5], 1
    %11 = vsyncpa %s10, 0
    %12 = vsyncpa [#allocation6], 0
    %s13 = scalar_lea.sflag [#allocation6], 1
    %14 = vsyncpa %s13, 0
    loop: start=0, step=1, limit=4
    $region2: #{tpu_custom_call.1} parent=1 // loop_pre_header
      _
    $region3: #{tpu_custom_call.1} parent=1 // loop_header
      %s16 = sphi 0, %s20
      %p17 = scmp.ge.s32.totalorder %s16, 4
      %s23 = sphi 0, %s35
      %s24 = sphi 0, %s31
      %s25 = sphi 0, %s23
      %s26 = sphi 0, %s24
      %s27 = sphi 0, %s25
      %s28 = sphi 0, %s26
      %s40 = sphi 0, %s42
      %s43 = sphi 0, %s40
      %s44 = sphi 0, %s43
      %s60 = sphi 0, %s44
      %s66 = sphi 0, %s68
      %s69 = sphi 0, %s66
      %s70 = sphi 0, %s69
      %s86 = sphi 0, %s70
      %s94 = sphi 0, %s96
      %s97 = sphi 0, %s94
      %s98 = sphi 0, %s97
      %s114 = sphi 0, %s98
    $region4: #{tpu_custom_call.1} parent=1 // loop_header_branch
      %19 = sbr.rel (%p17) target = $region8
    $region5: #{tpu_custom_call.1} parent=1 // loop_body
      %s21 = ssub.s32 %s16, 1
      %s22 = ssub.s32 %s16, 2
      %s29 = sadd.s32 1, %s24
      %p30 = scmp.ge.s32.totalorder %s29, 2
      %s31 = scalar_select %p30, 0, %s29
      %s32 = sadd.s32 1, %s23
      %s33 = scalar_select %p30, %s32, %s23
      %p34 = scmp.ge.s32.totalorder %s33, 1
      %s35 = scalar_select %p34, 0, %s33
      %s36 = ssub.s32 %s24, %s31
      %s37 = ssub.s32 %s23, %s35
      %s38 = sor.u32 %s36, %s37
      %p39 = scmp.eq.s32.totalorder %s38, 0
      %s41 = sadd.s32 %s40, 1
      %s42 = scalar_select %p39, %s40, %s41
      %p45 = pneg %p39
      %p46 = scmp.eq.s32.totalorder %s16, 1
      %p47 = por %p45, %p46
      %p48 = scmp.ne.s32.totalorder %s40, %s43
      %p49 = scmp.eq.s32.totalorder %s16, 0
      %p50 = por %p48, %p49
      %p51 = scmp.ne.s32.totalorder %s40, %s43
      %p52 = scmp.eq.s32.totalorder %s21, 1
      %p53 = por %p51, %p52
      %p54 = scmp.ne.s32.totalorder %s43, %s44
      %p55 = scmp.eq.s32.totalorder %s21, 0
      %p56 = por %p54, %p55
      %p57 = scmp.ne.s32.totalorder %s43, %s44
      %p58 = scmp.eq.s32.totalorder %s22, 1
      %p59 = por %p57, %p58
      %p61 = scmp.ne.s32.totalorder %s44, %s60
      %p62 = scmp.eq.s32.totalorder %s22, 0
      %p63 = por %p61, %p62
      %s64 = ssub.s32 %s23, %s35
      %p65 = scmp.eq.s32.totalorder %s64, 0
      %s67 = sadd.s32 %s66, 1
      %s68 = scalar_select %p65, %s66, %s67
      %p71 = pneg %p65
      %p72 = scmp.eq.s32.totalorder %s16, 1
      %p73 = por %p71, %p72
      %p74 = scmp.ne.s32.totalorder %s66, %s69
      %p75 = scmp.eq.s32.totalorder %s16, 0
      %p76 = por %p74, %p75
      %p77 = scmp.ne.s32.totalorder %s66, %s69
      %p78 = scmp.eq.s32.totalorder %s21, 1
      %p79 = por %p77, %p78
      %p80 = scmp.ne.s32.totalorder %s69, %s70
      %p81 = scmp.eq.s32.totalorder %s21, 0
      %p82 = por %p80, %p81
      %p83 = scmp.ne.s32.totalorder %s69, %s70
      %p84 = scmp.eq.s32.totalorder %s22, 1
      %p85 = por %p83, %p84
      %p87 = scmp.ne.s32.totalorder %s70, %s86
      %p88 = scmp.eq.s32.totalorder %s22, 0
      %p89 = por %p87, %p88
      %s90 = ssub.s32 %s24, %s31
      %s91 = ssub.s32 %s23, %s35
      %s92 = sor.u32 %s90, %s91
      %p93 = scmp.eq.s32.totalorder %s92, 0
      %s95 = sadd.s32 %s94, 1
      %s96 = scalar_select %p93, %s94, %s95
      %p99 = pneg %p93
      %p100 = scmp.eq.s32.totalorder %s16, 1
      %p101 = por %p99, %p100
      %p102 = scmp.ne.s32.totalorder %s94, %s97
      %p103 = scmp.eq.s32.totalorder %s16, 0
      %p104 = por %p102, %p103
      %p105 = scmp.ne.s32.totalorder %s94, %s97
      %p106 = scmp.eq.s32.totalorder %s21, 1
      %p107 = por %p105, %p106
      %p108 = scmp.ne.s32.totalorder %s97, %s98
      %p109 = scmp.eq.s32.totalorder %s21, 0
      %p110 = por %p108, %p109
      %p111 = scmp.ne.s32.totalorder %s97, %s98
      %p112 = scmp.eq.s32.totalorder %s22, 1
      %p113 = por %p111, %p112
      %p115 = scmp.ne.s32.totalorder %s98, %s114
      %p116 = scmp.eq.s32.totalorder %s22, 0
      %p117 = por %p115, %p116
      %p118 = scmp.le.s32.totalorder 1, %s16
      %p119 = scmp.lt.s32.totalorder %s16, 3
      %p120 = pnand %p118, %p119
      %p121 = pneg %p120
      // Predicated region
      $region9: #{tpu_custom_call.1} parent=5 // pred_check
        _
      $region10: #{tpu_custom_call.1} parent=5 // pred_check_branch
        %123 = sbr.rel (%p120) target = $region12
      $region11: #{tpu_custom_call.1} parent=5 // pred_region
        %s124 = ssub.s32 %s16, 1
        // Predicated region
        $region13: #{tpu_custom_call.1} parent=11 // pred_check
          %p125 = pneg %p82
        $region14: #{tpu_custom_call.1} parent=11 // pred_check_branch
          %127 = sbr.rel (%p125) target = $region16
        $region15: #{tpu_custom_call.1} parent=11 // pred_region
          %p128 = scmp.lt.s32.totalorder %s25, 0
          %s129 = scalar_select %p128, %s25, 0
          %s130 = smul.addr %s129, 2
          %s131 = scalar_lea.vmem %s2, %s130
        $region16: #{tpu_custom_call.1} parent=11 // pred_fallthru
          _
      $region12: #{tpu_custom_call.1} parent=5 // pred_fallthru
        _
      %p132 = scmp.lt.s32.totalorder %s16, 2
      // Predicated region
      $region17: #{tpu_custom_call.1} parent=5 // pred_check
        %p133 = pneg %p132
      $region18: #{tpu_custom_call.1} parent=5 // pred_check_branch
        %135 = sbr.rel (%p133) target = $region20
      $region19: #{tpu_custom_call.1} parent=5 // pred_region
        // Predicated region
        $region21: #{tpu_custom_call.1} parent=19 // pred_check
          %p136 = pneg %p50
        $region22: #{tpu_custom_call.1} parent=19 // pred_check_branch
          %138 = sbr.rel (%p136) target = $region24
        $region23: #{tpu_custom_call.1} parent=19 // pred_region
          %s139 = sand.u32 %s40, 1
          %s140 = scalar_lea.sflag [#allocation5], %s139
          %s141 = sand.u32 %s40, 1
          %s142 = smul.addr %s141, 2
          %s143 = scalar_lea.vmem [#allocation4], %s142
          %s145 = ssub.s32 32, 32
          %146 = vsyncadd %s140, %s145
          %s147 = sadd.s32 %s23, %s24
          %s148 = smul.addr %s147, 32
          %s149 = scalar_lea.hbm %s1, %s148
          %s151 = sshll.u32 %s143, 4
          %s152 = int_to_ptr.vmem [resolvable:$true] %s151
          %154 = dma.hbm_to_vmem [thread:$0]  %s149, 32, %s152, %s140
        $region24: #{tpu_custom_call.1} parent=19 // pred_fallthru
          _
      $region20: #{tpu_custom_call.1} parent=5 // pred_fallthru
        _
      %p155 = scmp.le.s32.totalorder 1, %s16
      %p156 = scmp.lt.s32.totalorder %s16, 3
      %p157 = pnand %p155, %p156
      %p158 = pneg %p157
      // Predicated region
      $region25: #{tpu_custom_call.1} parent=5 // pred_check
        _
      $region26: #{tpu_custom_call.1} parent=5 // pred_check_branch
        %160 = sbr.rel (%p157) target = $region28
      $region27: #{tpu_custom_call.1} parent=5 // pred_region
        %s161 = ssub.s32 %s16, 1
        %s162 = sand.u32 %s43, 1
        %s163 = scalar_lea.sflag [#allocation5], %s162
        %s164 = sand.u32 %s43, 1
        %s165 = smul.addr %s164, 2
        %s166 = scalar_lea.vmem [#allocation4], %s165
        // Predicated region
        $region29: #{tpu_custom_call.1} parent=27 // pred_check
          %p167 = pneg %p56
        $region30: #{tpu_custom_call.1} parent=27 // pred_check_branch
          %169 = sbr.rel (%p167) target = $region32
        $region31: #{tpu_custom_call.1} parent=27 // pred_region
          %170 = dma.done %s163, 32
        $region32: #{tpu_custom_call.1} parent=27 // pred_fallthru
          _
        %s171 = sand.u32 %s43, 1
        %s172 = scalar_lea.sflag [#allocation5], %s171
        %s173 = sand.u32 %s43, 1
        %s174 = smul.addr %s173, 2
        %s175 = scalar_lea.vmem [#allocation4], %s174
        %p176 = pneg %p56
        %p177 = pneg %p53
        %p178 = scmp.lt.s32.totalorder %s25, 0
        %s179 = scalar_select %p178, %s25, 0
        %s180 = smul.addr %s179, 2
        %s181 = scalar_lea.vmem %s2, %s180
        %p182 = pneg %p82
        %p183 = pneg %p79
        %p184 = pneg %p110
        %p185 = pneg %p107
        %s186 = sand.u32 %s97, 1
        %s187 = scalar_lea.sflag [#allocation6], %s186
        %s188 = sand.u32 %s97, 1
        %s189 = smul.addr %s188, 2
        %s190 = scalar_lea.vmem [#allocation7], %s189
        %p191 = scmp.lt.s32.totalorder %s25, 0
        %s192 = scalar_select %p191, %s25, 0
        %s193 = smul.addr %s192, 2
        %s194 = scalar_lea.vmem %s2, %s193
        %v195 = vld [vmem:[%s166] sm:$0x3]
        %v196 = vld [vmem:[%s194] sm:$0x3]
        %v197 = vadd.f32 %v195, %v196
        %v198 = vlaneseq
        %v199 = vshrl.u32 %v198, 7
        %v200 = vlaneseq
        %v201 = vand.u32 %v200, 127
        %s202 = smul.u32 %s25, 2
        %v203 = vstv %s202
        %v204 = vadd.s32 %v203, %v199
        %v205 = vmul.u32 %v204, 128
        %v206 = vadd.s32 %v205, %v201
        %s207 = smul.u32 %s26, 256
        %v208 = vstv %s207
        %v209 = vadd.s32 %v208, %v206
        %s210 = sld [smem:[#allocation3]]
        %s211 = sadd.s32 %s210, 2654435769
        %s212 = sshrl.u32 %s211, 16
        %s213 = sxor.u32 %s211, %s212
        %s214 = smul.u32 %s213, 2146121005
        %s215 = sshrl.u32 %s214, 15
        %s216 = sxor.u32 %s214, %s215
        %s217 = smul.u32 %s216, 2221713035
        %s218 = sshrl.u32 %s217, 16
        %s219 = sxor.u32 %s217, %s218
        %v220 = vstv %s219
        %v221 = vxor.u32 %v209, %v220
        %v222 = vshrl.u32 %v221, 16
        %v223 = vxor.u32 %v221, %v222
        %v224 = vmul.u32 %v223, 2146121005
        %v225 = vshrl.u32 %v224, 15
        %v226 = vxor.u32 %v224, %v225
        %v227 = vmul.u32 %v226, 2221713035
        %v228 = vshrl.u32 %v227, 16
        %v229 = vxor.u32 %v227, %v228
        %v230 = vshrl.u32 %v229, 1
        %vm231 = vcmp.ge.s32.totalorder %v230, 214748364
        %v232 = vsel %vm231, 1, 0
        %v233 = vcvt.s32.f32 %v232
        %v234 = vmul.f32 %v233, 1.1111112
        %v235 = vmul.f32 %v197, %v234
        %236 = vst [vmem:[%s190] sm:$0x3] %v235
        %s237 = sand.u32 %s97, 1
        %s238 = scalar_lea.sflag [#allocation6], %s237
        %s239 = sand.u32 %s97, 1
        %s240 = smul.addr %s239, 2
        %s241 = scalar_lea.vmem [#allocation7], %s240
        // Predicated region
        $region33: #{tpu_custom_call.1} parent=27 // pred_check
          %p242 = pneg %p107
        $region34: #{tpu_custom_call.1} parent=27 // pred_check_branch
          %244 = sbr.rel (%p242) target = $region36
        $region35: #{tpu_custom_call.1} parent=27 // pred_region
          %s246 = ssub.s32 32, 32
          %247 = vsyncadd %s238, %s246
          %s248 = sadd.s32 %s25, %s26
          %s249 = smul.addr %s248, 32
          %s250 = scalar_lea.hbm %s3, %s249
          %s252 = sshll.u32 %s241, 4
          %s253 = int_to_ptr.vmem [resolvable:$true] %s252
          %255 = dma.vmem_to_hbm [thread:$0]  %s253, 32, %s250, %s238
        $region36: #{tpu_custom_call.1} parent=27 // pred_fallthru
          _
      $region28: #{tpu_custom_call.1} parent=5 // pred_fallthru
        _
      %p256 = scmp.le.s32.totalorder 2, %s16
      // Predicated region
      $region37: #{tpu_custom_call.1} parent=5 // pred_check
        %p257 = pneg %p256
      $region38: #{tpu_custom_call.1} parent=5 // pred_check_branch
        %259 = sbr.rel (%p257) target = $region40
      $region39: #{tpu_custom_call.1} parent=5 // pred_region
        %s260 = ssub.s32 %s16, 2
        // Predicated region
        $region41: #{tpu_custom_call.1} parent=39 // pred_check
          %p261 = pneg %p113
        $region42: #{tpu_custom_call.1} parent=39 // pred_check_branch
          %263 = sbr.rel (%p261) target = $region44
        $region43: #{tpu_custom_call.1} parent=39 // pred_region
          %s264 = sand.u32 %s98, 1
          %s265 = scalar_lea.sflag [#allocation6], %s264
          %s266 = sand.u32 %s98, 1
          %s267 = smul.addr %s266, 2
          %s268 = scalar_lea.vmem [#allocation7], %s267
          %269 = dma.done %s265, 32
        $region44: #{tpu_custom_call.1} parent=39 // pred_fallthru
          _
      $region40: #{tpu_custom_call.1} parent=5 // pred_fallthru
        _
    $region6: #{tpu_custom_call.1} parent=1 // loop_footer
      %s20 = sadd.s32 1, %s16
    $region7: #{tpu_custom_call.1} parent=1 // loop_footer_branch
      %15 = sbr.rel target = $region3
    $region8: #{tpu_custom_call.1} parent=1 // loop_exit
      _
    %270 = vsyncpa [#allocation5], 1
    %s271 = scalar_lea.sflag [#allocation5], 1
    %272 = vsyncpa %s271, 1
    %273 = vsyncpa [#allocation6], 1
    %s274 = scalar_lea.sflag [#allocation6], 1
    %275 = vsyncpa %s274, 1

</llo_original>
